<compile_context>
chip_gen: v5e
topology: v5e:2x2
jax: 0.10.0
libtpu: 0.0.40
codegen_flags: <defaults>
</compile_context>

<pallas_src>
import functools

import jax
import jax.numpy as jnp
from jax.experimental import pallas as pl
from jax.experimental.pallas import tpu as pltpu

_NEG_BIG = -1e30  # finite "minus infinity": avoids inf - inf = NaN paths


def _contrastive_loss_kernel(feat_row_ref, feat_col_ref, loss_ref,
                             m_ref, l_ref, pos_ref, *, inv_temp, batch):
    """One (row_tile, col_tile) step of the 2B x 2B similarity reduction."""
    i = pl.program_id(0)                     # row-tile index  ("parallel")
    k = pl.program_id(1)                     # col-tile index  (reduction, last)

    tile_m = feat_row_ref.shape[0]
    tile_n = feat_col_ref.shape[0]
    row0 = i * tile_m                        # global row offset of this tile
    col0 = k * tile_n                        # global col offset of this tile

    @pl.when(k == 0)
    def _init():
        m_ref[...] = jnp.full(m_ref.shape, _NEG_BIG, jnp.float32)
        l_ref[...] = jnp.zeros(l_ref.shape, jnp.float32)
        pos_ref[...] = jnp.zeros(pos_ref.shape, jnp.float32)

    # Apply 1/T to the (tile_m, D) row operand (cheaper than scaling the
    # (tile_m, tile_n) similarity tile when D < tile_n).  Weakly-typed python
    # scalar keeps the MXU feed dtype (bf16 stays bf16).
    q = feat_row_ref[...] * inv_temp         # [TM, D]
    c = feat_col_ref[...]                    # [TN, D]

    # s[r, c] = <feat_r, feat_c> / T; 'md,nd->mn' contraction, f32 MXU acc.
    # TODO(synk): verify with pl.lower_as_mlir that no per-step vxpose of the
    # column tile is emitted; if it is, pre-transpose features to [D, 2B] in
    # the wrapper and make column blocks (D, tile_n).
    s = jax.lax.dot_general(
        q, c, dimension_numbers=(((1,), (1,)), ((), ())),
        preferred_element_type=jnp.float32)  # [TM, TN] f32

    # ---- positive-pair logit: column (row + B) mod 2B of each row. ---------
    # Row tiles never straddle the half boundary (tile_m divides B), so the
    # partner columns of this row tile are the contiguous range
    # [partner0, partner0 + tile_m), hitting only one or two column tiles.
    partner0 = jnp.where(row0 < batch, row0 + batch, row0 - batch)
    partner_overlap = jnp.logical_and(col0 < partner0 + tile_m,
                                      partner0 < col0 + tile_n)

    @pl.when(partner_overlap)
    def _accumulate_pos():
        prow = partner0 + jax.lax.broadcasted_iota(jnp.int32, (tile_m, 1), 0)
        pcol = col0 + jax.lax.broadcasted_iota(jnp.int32, (1, tile_n), 1)
        is_partner = pcol == prow                       # [TM, TN] via broadcast
        pos_ref[...] += jnp.sum(jnp.where(is_partner, s, 0.0),
                                axis=-1, keepdims=True)

    # ---- mask the self-similarity diagonal only on tiles that touch it. ----
    diag_overlap = jnp.logical_and(col0 < row0 + tile_m, row0 < col0 + tile_n)

    def _mask_diag(sv):
        rr = row0 + jax.lax.broadcasted_iota(jnp.int32, (tile_m, 1), 0)
        cc = col0 + jax.lax.broadcasted_iota(jnp.int32, (1, tile_n), 1)
        return jnp.where(rr == cc, _NEG_BIG, sv)

    s = jax.lax.cond(diag_overlap, _mask_diag, lambda sv: sv, s)

    # ---- online log-sum-exp over the row (col tiles = reduction axis). -----
    m_prev = m_ref[...]                                         # [TM, 1]
    m_new = jnp.maximum(m_prev, jnp.max(s, axis=-1, keepdims=True))
    alpha = jnp.exp(m_prev - m_new)
    p = jnp.exp(s - m_new)                                      # masked -> 0
    l_ref[...] = alpha * l_ref[...] + jnp.sum(p, axis=-1, keepdims=True)
    m_ref[...] = m_new

    @pl.when(k == pl.num_programs(1) - 1)
    def _finalize():
        # loss_r = log(sum_{j != r} exp(s_rj)) - s_{r, partner(r)}
        # (tile_m, 1) store: written once per row tile, so the masked vst of a
        # lane-1 block is negligible (review: lowest-priority item, kept as-is).
        loss_ref[...] = m_ref[...] + jnp.log(l_ref[...]) - pos_ref[...]


def _pick_tile(total, cap):
    """Largest multiple of 8 that divides `total` and is <= cap."""
    cap = max(8, min(int(cap), int(total)))
    for t in range(cap, 7, -1):
        if total % t == 0 and t % 8 == 0:
            return t
    return 8


def _vmem_bytes(tile_m, tile_n, d, in_itemsize):
    """Rough per-step VMEM footprint (double-buffered streams + f32 temps)."""
    streams = 2 * (tile_m + tile_n) * d * in_itemsize   # row + col, 2 buffers
    out = 2 * tile_m * 4
    scratch = 3 * tile_m * 4
    temps = 4 * tile_m * tile_n * 4                     # s, exp(s), compares...
    return streams + out + scratch + temps


def contrastive_loss(features_1, features_2, temperature=0.05, topk=16,
                     tile_m=None, tile_n=None, mxu_dtype=None,
                     col_buffers=None, vmem_limit_bytes=None):
    """VASCL ContrastiveLoss.forward.  Returns {'loss': scalar}.

    mxu_dtype=jnp.bfloat16 feeds the MXU in bf16 (~4x MXU throughput, half the
    HBM/VMEM bytes) at bf16 input precision; default keeps the native dtype.
    col_buffers=3 deepens the column-stream pipeline (useful on v5e).
    """
    del topk  # unused by the PyTorch forward; kept for interface parity.
    B, D = features_1.shape
    assert features_2.shape == (B, D)
    assert B % 8 == 0, "batch size must be a multiple of 8 (TPU sublane)"

    # Layout plumbing only (no compute): stacked [2B, D] features, optionally
    # cast once to the MXU feed dtype.
    features = jnp.concatenate([features_1, features_2], axis=0)
    if mxu_dtype is not None:
        features = features.astype(mxu_dtype)
    itemsize = jnp.dtype(features.dtype).itemsize

    # --- tile selection & scoped-VMEM budget (generation aware). ------------
    try:
        vmem_cap = int(pltpu.get_tpu_info().vmem_capacity_bytes)
    except Exception:
        vmem_cap = 64 * 1024 * 1024           # v7x per-TC worst case
    budget = (vmem_cap * 3) // 4              # leave compiler headroom

    # tile_m divides B => row tiles never straddle the half boundary and
    # n_row = 2B/tile_m is always even (even megacore split on v7x).
    tile_m = _pick_tile(B, tile_m if tile_m is not None else 512)
    tile_n = _pick_tile(2 * B, tile_n if tile_n is not None else 512)
    while _vmem_bytes(tile_m, tile_n, D, itemsize) > budget:
        if tile_n >= tile_m and tile_n > 8:   # shrink the column re-stream first
            tile_n = _pick_tile(2 * B, tile_n // 2)
        elif tile_m > 8:
            tile_m = _pick_tile(B, tile_m // 2)
        else:
            break
    if vmem_limit_bytes is None:
        need = _vmem_bytes(tile_m, tile_n, D, itemsize)
        vmem_limit_bytes = min(budget, max(2 * need, 32 * 1024 * 1024))

    n_row = (2 * B) // tile_m
    n_col = (2 * B) // tile_n

    kernel = functools.partial(_contrastive_loss_kernel,
                               inv_temp=1.0 / float(temperature), batch=B)

    row_spec = pl.BlockSpec((tile_m, D), lambda i, k: (i, 0))
    col_kwargs = {}
    if col_buffers is not None and col_buffers != 2:
        # v5e: deeper buffering on the only per-step-changing stream hides its
        # exposed DMA latency; VMEM there easily affords the extra buffer.
        col_kwargs["pipeline_mode"] = pl.Buffered(int(col_buffers))
    col_spec = pl.BlockSpec((tile_n, D), lambda i, k: (k, 0), **col_kwargs)
    out_spec = pl.BlockSpec((tile_m, 1), lambda i, k: (i, 0))

    per_row_loss = pl.pallas_call(
        kernel,
        out_shape=jax.ShapeDtypeStruct((2 * B, 1), jnp.float32),
        grid_spec=pltpu.PrefetchScalarGridSpec(
            num_scalar_prefetch=0,
            grid=(n_row, n_col),              # col axis = reduction, last
            in_specs=[row_spec, col_spec],
            out_specs=out_spec,
            scratch_shapes=[pltpu.VMEM((tile_m, 1), jnp.float32),   # running max
                            pltpu.VMEM((tile_m, 1), jnp.float32),   # running sum
                            pltpu.VMEM((tile_m, 1), jnp.float32)],  # positive logit
        ),
        compiler_params=pltpu.CompilerParams(
            dimension_semantics=("parallel", "arbitrary"),
            vmem_limit_bytes=int(vmem_limit_bytes)),
    )(features, features)

    # Tiny final reduction in XLA (keeps the megacore-parallel row axis free of
    # a cross-tile scalar race).
    return {'loss': jnp.mean(per_row_loss)}


# ----------------------------------------------------------------------------
# Pure-JAX references (validation only).
# ----------------------------------------------------------------------------
def _reference(f1, f2, temperature=0.05):
    """Literal replica of the PyTorch forward (no numerical stabilization)."""
    B = f1.shape[0]
    feats = jnp.concatenate([f1, f2], axis=0)
    pos = jnp.exp(jnp.sum(f1 * f2, axis=-1) / temperature)
    pos = jnp.concatenate([pos, pos], axis=0)
    neg = jnp.exp(jnp.dot(feats, feats.T,
                          precision=jax.lax.Precision.HIGHEST) / temperature)
    mask = ~jnp.tile(jnp.eye(B, dtype=bool), (2, 2))
    Ng = jnp.sum(jnp.where(mask, neg, 0.0), axis=-1)
    return jnp.mean(-jnp.log(pos / (Ng + pos)))


def _reference_stable(f1, f2, temperature=0.05):
    """Same math, log-sum-exp stabilized (matches the kernel for any scale)."""
    B = f1.shape[0]
    feats = jnp.concatenate([f1, f2], axis=0)
    logits = jnp.dot(feats, feats.T,
                     precision=jax.lax.Precision.HIGHEST) / temperature
    logits = jnp.where(jnp.eye(2 * B, dtype=bool), -jnp.inf, logits)
    pos_logit = jnp.sum(f1 * f2, axis=-1) / temperature
    pos_logit = jnp.concatenate([pos_logit, pos_logit], axis=0)
    return jnp.mean(jax.nn.logsumexp(logits, axis=-1) - pos_logit)


if __name__ == "__main__":
    key = jax.random.PRNGKey(0)
    k1, k2 = jax.random.split(key)
    B, D = 16, 32  # small shapes: batch=16, hidden=32
    f1 = jax.random.normal(k1, (B, D), dtype=jnp.float32)
    f2 = jax.random.normal(k2, (B, D), dtype=jnp.float32)

    f1n = f1 / jnp.linalg.norm(f1, axis=-1, keepdims=True)
    f2n = f2 / jnp.linalg.norm(f2, axis=-1, keepdims=True)

    # (1) f32, L2-normalized features, small tiles -> 4x4 grid exercising the
    #     guarded diagonal-mask / partner-extraction paths on a multi-tile
    #     grid; compared against the literal (unstabilized) PyTorch formula.
    out = contrastive_loss(f1n, f2n, temperature=0.05, topk=16,
                           tile_m=8, tile_n=8)
    loss = jax.block_until_ready(out['loss'])
    ref = jax.block_until_ready(_reference(f1n, f2n, 0.05))
    assert jnp.isfinite(loss), loss
    assert jnp.allclose(loss, ref, rtol=1e-3, atol=1e-3), (loss, ref)

    # (2) f32, unnormalized features (the naive exp() formula overflows at
    #     T=0.05); tiles chosen (tile_m > tile_n) so a row tile's partner
    #     columns straddle two column tiles.  Online LSE stays finite.
    out2 = contrastive_loss(f1, f2, temperature=0.05, tile_m=16, tile_n=8)
    loss2 = jax.block_until_ready(out2['loss'])
    ref2 = jax.block_until_ready(_reference_stable(f1, f2, 0.05))
    assert jnp.isfinite(loss2), loss2
    assert jnp.allclose(loss2, ref2, rtol=5e-3, atol=5e-2), (loss2, ref2)

    # (3) bf16 MXU feed with auto tiles / auto VMEM budget; looser tolerance
    #     accounts for bf16 input rounding (the documented precision trade).
    out3 = contrastive_loss(f1n, f2n, temperature=0.05, mxu_dtype=jnp.bfloat16)
    loss3 = jax.block_until_ready(out3['loss'])
    ref3 = jax.block_until_ready(_reference_stable(f1n, f2n, 0.05))
    assert jnp.isfinite(loss3), loss3
    assert jnp.allclose(loss3, ref3, rtol=5e-2, atol=3e-1), (loss3, ref3)

    print("KERNEL_OK")
</pallas_src>

<mosaic_0001>
module attributes {stable_mosaic.version = 11 : i64} {
  func.func @_contrastive_loss_kernel(%arg0: i32, %arg1: i32, %arg2: memref<8x32xf32, #tpu.memory_space<vmem>>, %arg3: memref<8x32xf32, #tpu.memory_space<vmem>>, %arg4: memref<8x1xf32, #tpu.memory_space<vmem>>, %arg5: memref<8x1xf32, #tpu.memory_space<vmem>>, %arg6: memref<8x1xf32, #tpu.memory_space<vmem>>, %arg7: memref<8x1xf32, #tpu.memory_space<vmem>>) attributes {dimension_semantics = [#tpu.dimension_semantics<parallel>, #tpu.dimension_semantics<arbitrary>], iteration_bounds = array<i64: 4, 4>, scalar_prefetch = 0 : i64, scratch_operands = 3 : i64, tpu.core_type = #tpu.core_type<tc>, window_params = [{transform_indices = @transform_0, window_bounds = array<i64: 8, 32>}, {transform_indices = @transform_1, window_bounds = array<i64: 8, 32>}, {transform_indices = @transform_2, window_bounds = array<i64: 8, 1>}]} {
    %c8_i32 = arith.constant 8 : i32
    %0 = arith.muli %arg0, %c8_i32 : i32
    %c8_i32_0 = arith.constant 8 : i32
    %1 = arith.muli %arg1, %c8_i32_0 : i32
    %c0_i32 = arith.constant 0 : i32
    %2 = arith.cmpi eq, %arg1, %c0_i32 : i32
    %3 = arith.extui %2 : i1 to i32
    %c0_i32_1 = arith.constant 0 : i32
    %4 = arith.cmpi ne, %3, %c0_i32_1 : i32
    scf.if %4 {
      %cst_25 = arith.constant -1.000000e+30 : f32
      %48 = vector.broadcast %cst_25 : f32 to vector<8x1xf32>
      %c0_26 = arith.constant 0 : index
      %c0_27 = arith.constant 0 : index
      %49 = vector.load %arg5[%c0_26, %c0_27] : memref<8x1xf32, #tpu.memory_space<vmem>>, vector<8x1xf32>
      tpu.vector_store %arg5[%c0_26, %c0_27], %48 {strides = array<i32>} : memref<8x1xf32, #tpu.memory_space<vmem>>, vector<8x1xf32>,
      %cst_28 = arith.constant 0.000000e+00 : f32
      %50 = vector.broadcast %cst_28 : f32 to vector<8x1xf32>
      %c0_29 = arith.constant 0 : index
      %c0_30 = arith.constant 0 : index
      %51 = vector.load %arg6[%c0_29, %c0_30] : memref<8x1xf32, #tpu.memory_space<vmem>>, vector<8x1xf32>
      tpu.vector_store %arg6[%c0_29, %c0_30], %50 {strides = array<i32>} : memref<8x1xf32, #tpu.memory_space<vmem>>, vector<8x1xf32>,
      %cst_31 = arith.constant 0.000000e+00 : f32
      %52 = vector.broadcast %cst_31 : f32 to vector<8x1xf32>
      %c0_32 = arith.constant 0 : index
      %c0_33 = arith.constant 0 : index
      %53 = vector.load %arg7[%c0_32, %c0_33] : memref<8x1xf32, #tpu.memory_space<vmem>>, vector<8x1xf32>
      tpu.vector_store %arg7[%c0_32, %c0_33], %52 {strides = array<i32>} : memref<8x1xf32, #tpu.memory_space<vmem>>, vector<8x1xf32>,
    } else {
    }
    %c0 = arith.constant 0 : index
    %c0_2 = arith.constant 0 : index
    %5 = vector.load %arg2[%c0, %c0_2] : memref<8x32xf32, #tpu.memory_space<vmem>>, vector<8x32xf32>
    %cst = arith.constant 2.000000e+01 : f32
    %6 = vector.broadcast %cst : f32 to vector<8x32xf32>
    %7 = arith.mulf %5, %6 : vector<8x32xf32>
    %c0_3 = arith.constant 0 : index
    %c0_4 = arith.constant 0 : index
    %8 = vector.load %arg3[%c0_3, %c0_4] : memref<8x32xf32, #tpu.memory_space<vmem>>, vector<8x32xf32>
    %cst_5 = arith.constant dense<0.000000e+00> : vector<8x8xf32>
    %9 = tpu.matmul %7, %8, %cst_5 {dimension_numbers = #tpu.dot_dimension_numbers<[1], [1], [0], [0], [0, 0, 1, 0], [], []>} : vector<8x32xf32>, vector<8x32xf32>, vector<8x8xf32> -> vector<8x8xf32>
    %c16_i32 = arith.constant 16 : i32
    %10 = arith.cmpi slt, %0, %c16_i32 : i32
    %c16_i32_6 = arith.constant 16 : i32
    %11 = arith.addi %0, %c16_i32_6 : i32
    %c16_i32_7 = arith.constant 16 : i32
    %12 = arith.subi %0, %c16_i32_7 : i32
    %13 = arith.select %10, %11, %12 : i32
    %c8_i32_8 = arith.constant 8 : i32
    %14 = arith.addi %13, %c8_i32_8 : i32
    %15 = arith.cmpi slt, %1, %14 : i32
    %c8_i32_9 = arith.constant 8 : i32
    %16 = arith.addi %1, %c8_i32_9 : i32
    %17 = arith.cmpi slt, %13, %16 : i32
    %18 = arith.andi %15, %17 : i1
    %19 = arith.extui %18 : i1 to i32
    %c0_i32_10 = arith.constant 0 : i32
    %20 = arith.cmpi ne, %19, %c0_i32_10 : i32
    scf.if %20 {
      %48 = tpu.iota {dimensions = array<i32: 0>} : vector<8x1xi32>
      %49 = vector.broadcast %13 : i32 to vector<8x1xi32>
      %50 = arith.addi %49, %48 : vector<8x1xi32>
      %51 = tpu.iota {dimensions = array<i32: 1>} : vector<1x8xi32>
      %52 = vector.broadcast %1 : i32 to vector<1x8xi32>
      %53 = arith.addi %52, %51 : vector<1x8xi32>
      %54 = vector.broadcast %53 : vector<1x8xi32> to vector<8x8xi32>
      %55 = vector.broadcast %50 : vector<8x1xi32> to vector<8x8xi32>
      %56 = arith.cmpi eq, %54, %55 : vector<8x8xi32>
      %c0_25 = arith.constant 0 : index
      %c0_26 = arith.constant 0 : index
      %57 = vector.load %arg7[%c0_25, %c0_26] : memref<8x1xf32, #tpu.memory_space<vmem>>, vector<8x1xf32>
      %cst_27 = arith.constant 0.000000e+00 : f32
      %58 = vector.broadcast %cst_27 : f32 to vector<8x8xf32>
      %59 = arith.select %56, %9, %58 : vector<8x8xi1>, vector<8x8xf32>
      %cst_28 = arith.constant dense<0.000000e+00> : vector<8xf32>
      %60 = vector.multi_reduction <add>, %59, %cst_28 [1] : vector<8x8xf32> to vector<8xf32>
      %61 = vector.shape_cast %60 : vector<8xf32> to vector<8x1xf32>
      %62 = arith.addf %57, %61 : vector<8x1xf32>
      %c0_29 = arith.constant 0 : index
      %c0_30 = arith.constant 0 : index
      %63 = vector.load %arg7[%c0_29, %c0_30] : memref<8x1xf32, #tpu.memory_space<vmem>>, vector<8x1xf32>
      tpu.vector_store %arg7[%c0_29, %c0_30], %62 {strides = array<i32>} : memref<8x1xf32, #tpu.memory_space<vmem>>, vector<8x1xf32>,
    } else {
    }
    %c8_i32_11 = arith.constant 8 : i32
    %21 = arith.addi %0, %c8_i32_11 : i32
    %22 = arith.cmpi slt, %1, %21 : i32
    %c8_i32_12 = arith.constant 8 : i32
    %23 = arith.addi %1, %c8_i32_12 : i32
    %24 = arith.cmpi slt, %0, %23 : i32
    %25 = arith.andi %22, %24 : i1
    %26 = arith.extui %25 : i1 to i32
    %c0_i32_13 = arith.constant 0 : i32
    %27 = arith.cmpi ne, %26, %c0_i32_13 : i32
    %28 = scf.if %27 -> (vector<8x8xf32>) {
      %48 = tpu.iota {dimensions = array<i32: 0>} : vector<8x1xi32>
      %49 = vector.broadcast %0 : i32 to vector<8x1xi32>
      %50 = arith.addi %49, %48 : vector<8x1xi32>
      %51 = tpu.iota {dimensions = array<i32: 1>} : vector<1x8xi32>
      %52 = vector.broadcast %1 : i32 to vector<1x8xi32>
      %53 = arith.addi %52, %51 : vector<1x8xi32>
      %54 = vector.broadcast %50 : vector<8x1xi32> to vector<8x8xi32>
      %55 = vector.broadcast %53 : vector<1x8xi32> to vector<8x8xi32>
      %56 = arith.cmpi eq, %54, %55 : vector<8x8xi32>
      %cst_25 = arith.constant -1.000000e+30 : f32
      %57 = vector.broadcast %cst_25 : f32 to vector<8x8xf32>
      %58 = arith.select %56, %57, %9 : vector<8x8xi1>, vector<8x8xf32>
      scf.yield %58 : vector<8x8xf32>
    } else {
      scf.yield %9 : vector<8x8xf32>
    }
    %c0_14 = arith.constant 0 : index
    %c0_15 = arith.constant 0 : index
    %29 = vector.load %arg5[%c0_14, %c0_15] : memref<8x1xf32, #tpu.memory_space<vmem>>, vector<8x1xf32>
    %cst_16 = arith.constant dense<0xFF800000> : vector<8xf32>
    %30 = vector.multi_reduction <maximumf>, %28, %cst_16 [1] : vector<8x8xf32> to vector<8xf32>
    %31 = vector.shape_cast %30 : vector<8xf32> to vector<8x1xf32>
    %32 = arith.maximumf %29, %31 : vector<8x1xf32>
    %33 = arith.subf %29, %32 : vector<8x1xf32>
    %34 = math.exp %33 : vector<8x1xf32>
    %35 = vector.broadcast %32 : vector<8x1xf32> to vector<8x8xf32>
    %36 = arith.subf %28, %35 : vector<8x8xf32>
    %37 = math.exp %36 : vector<8x8xf32>
    %c0_17 = arith.constant 0 : index
    %c0_18 = arith.constant 0 : index
    %38 = vector.load %arg6[%c0_17, %c0_18] : memref<8x1xf32, #tpu.memory_space<vmem>>, vector<8x1xf32>
    %39 = arith.mulf %34, %38 : vector<8x1xf32>
    %cst_19 = arith.constant dense<0.000000e+00> : vector<8xf32>
    %40 = vector.multi_reduction <add>, %37, %cst_19 [1] : vector<8x8xf32> to vector<8xf32>
    %41 = vector.shape_cast %40 : vector<8xf32> to vector<8x1xf32>
    %42 = arith.addf %39, %41 : vector<8x1xf32>
    %c0_20 = arith.constant 0 : index
    %c0_21 = arith.constant 0 : index
    %43 = vector.load %arg6[%c0_20, %c0_21] : memref<8x1xf32, #tpu.memory_space<vmem>>, vector<8x1xf32>
    tpu.vector_store %arg6[%c0_20, %c0_21], %42 {strides = array<i32>} : memref<8x1xf32, #tpu.memory_space<vmem>>, vector<8x1xf32>,
    %c0_22 = arith.constant 0 : index
    %c0_23 = arith.constant 0 : index
    %44 = vector.load %arg5[%c0_22, %c0_23] : memref<8x1xf32, #tpu.memory_space<vmem>>, vector<8x1xf32>
    tpu.vector_store %arg5[%c0_22, %c0_23], %32 {strides = array<i32>} : memref<8x1xf32, #tpu.memory_space<vmem>>, vector<8x1xf32>,
    %c3_i32 = arith.constant 3 : i32
    %45 = arith.cmpi eq, %arg1, %c3_i32 : i32
    %46 = arith.extui %45 : i1 to i32
    %c0_i32_24 = arith.constant 0 : i32
    %47 = arith.cmpi ne, %46, %c0_i32_24 : i32
    scf.if %47 {
      %c0_25 = arith.constant 0 : index
      %c0_26 = arith.constant 0 : index
      %48 = vector.load %arg5[%c0_25, %c0_26] : memref<8x1xf32, #tpu.memory_space<vmem>>, vector<8x1xf32>
      %c0_27 = arith.constant 0 : index
      %c0_28 = arith.constant 0 : index
      %49 = vector.load %arg6[%c0_27, %c0_28] : memref<8x1xf32, #tpu.memory_space<vmem>>, vector<8x1xf32>
      %50 = math.log %49 : vector<8x1xf32>
      %51 = arith.addf %48, %50 : vector<8x1xf32>
      %c0_29 = arith.constant 0 : index
      %c0_30 = arith.constant 0 : index
      %52 = vector.load %arg7[%c0_29, %c0_30] : memref<8x1xf32, #tpu.memory_space<vmem>>, vector<8x1xf32>
      %53 = arith.subf %51, %52 : vector<8x1xf32>
      %c0_31 = arith.constant 0 : index
      %c0_32 = arith.constant 0 : index
      %54 = vector.load %arg4[%c0_31, %c0_32] : memref<8x1xf32, #tpu.memory_space<vmem>>, vector<8x1xf32>
      tpu.vector_store %arg4[%c0_31, %c0_32], %53 {strides = array<i32>} : memref<8x1xf32, #tpu.memory_space<vmem>>, vector<8x1xf32>,
    } else {
    }
    return
  }
  func.func @transform_0(%arg0: i32, %arg1: i32) -> (i32, i32) {
    %c0_i32 = arith.constant 0 : i32
    %c0_i32_0 = arith.constant 0 : i32
    return %arg0, %c0_i32 : i32, i32
  }
  func.func @transform_1(%arg0: i32, %arg1: i32) -> (i32, i32) {
    %c0_i32 = arith.constant 0 : i32
    %c0_i32_0 = arith.constant 0 : i32
    return %arg1, %c0_i32 : i32, i32
  }
  func.func @transform_2(%arg0: i32, %arg1: i32) -> (i32, i32) {
    %c0_i32 = arith.constant 0 : i32
    %c0_i32_0 = arith.constant 0 : i32
    return %arg0, %c0_i32 : i32, i32
  }
}

</mosaic_0001>

<llo_original>
// kernel: tpu_custom_call.1
$region0: #{tpu_custom_call.1}
  #allocation0 [shape = 'u32[]', space=smem, size = 0x4, offset = 0x4, fixed_abs, tag = 'smem constant byte address 0x4 - core index']
  #allocation1 [shape = 'u32[72,128]{1,0:T(1,128)}', space=vmem, size = 0x9000, scoped, tag = 'internal scratch']
  #allocation2 [shape = 'f32[8,1]{1,0:T(8,128)}', space=vmem, size = 0x1000, scoped, tag = 'scratch operand']
  #allocation3 [shape = 'f32[8,1]{1,0:T(8,128)}', space=vmem, size = 0x1000, scoped, tag = 'scratch operand']
  #allocation4 [shape = 'f32[8,1]{1,0:T(8,128)}', space=vmem, size = 0x1000, scoped, tag = 'scratch operand']
  %s0 = inlined_call_operand.hbm [shape: f32[32,32], index: 0, kind: input, shape index: {}]
  %s1 = inlined_call_operand.hbm [shape: f32[32,32], index: 1, kind: input, shape index: {}]
  %s2 = inlined_call_operand.vmem [shape: f32[32,1], index: 2, kind: output, shape index: {}]
  %s3 = sld [smem:[#allocation0]]
  $region69: #{tpu_custom_call.1} parent=0
    _
  %s5 = ssub.s32 1, %s3
  %s6 = scalar_select 0, %s5, %s3
  $region1: #{tpu_custom_call.1} parent=0
    #allocation5 [shape = 'u8[8192]{0}', space=vmem, size = 0x2000, scoped, tag = 'input window, operand 0']
    #allocation6 [shape = 's32[2]{0}', space=sflag, size = 0x8, scoped, tag = 'scoped memory for tpu_custom_call.1']
    #allocation7 [shape = 'u8[8192]{0}', space=vmem, size = 0x2000, scoped, tag = 'input window, operand 1']
    #allocation8 [shape = 's32[2]{0}', space=sflag, size = 0x8, scoped, tag = 'scoped memory for tpu_custom_call.1']
    %7 = vsyncpa [#allocation6], 0
    %s8 = scalar_lea.sflag [#allocation6], 1
    %9 = vsyncpa %s8, 0
    %10 = vsyncpa [#allocation8], 0
    %s11 = scalar_lea.sflag [#allocation8], 1
    %12 = vsyncpa %s11, 0
    loop: start=0, step=1, limit=18
    $region2: #{tpu_custom_call.1} parent=1 // loop_pre_header
      _
    $region3: #{tpu_custom_call.1} parent=1 // loop_header
      %s14 = sphi 0, %s18
      %p15 = scmp.ge.s32.totalorder %s14, 18
      %s21 = sphi 0, %s33
      %s22 = sphi 0, %s29
      %s23 = sphi 0, %s21
      %s24 = sphi 0, %s22
      %s25 = sphi 0, %s23
      %s26 = sphi 0, %s24
      %s36 = sphi 0, %s38
      %s39 = sphi 0, %s36
      %s40 = sphi 0, %s39
      %s56 = sphi 0, %s40
      %s62 = sphi 0, %s64
      %s65 = sphi 0, %s62
      %s66 = sphi 0, %s65
      %s82 = sphi 0, %s66
      %s88 = sphi 0, %s90
      %s91 = sphi 0, %s88
      %s92 = sphi 0, %s91
      %s108 = sphi 0, %s92
    $region4: #{tpu_custom_call.1} parent=1 // loop_header_branch
      %17 = sbr.rel (%p15) target = $region8
    $region5: #{tpu_custom_call.1} parent=1 // loop_body
      %s19 = ssub.s32 %s14, 1
      %s20 = ssub.s32 %s14, 2
      %s27 = sadd.s32 1, %s22
      %p28 = scmp.ge.s32.totalorder %s27, 4
      %s29 = scalar_select %p28, 0, %s27
      %s30 = sadd.s32 1, %s21
      %s31 = scalar_select %p28, %s30, %s21
      %p32 = scmp.ge.s32.totalorder %s31, 4
      %s33 = scalar_select %p32, 0, %s31
      %s34 = ssub.s32 %s21, %s33
      %p35 = scmp.eq.s32.totalorder %s34, 0
      %s37 = sadd.s32 %s36, 1
      %s38 = scalar_select %p35, %s36, %s37
      %p41 = pneg %p35
      %p42 = scmp.eq.s32.totalorder %s14, 15
      %p43 = por %p41, %p42
      %p44 = scmp.ne.s32.totalorder %s36, %s39
      %p45 = scmp.eq.s32.totalorder %s14, 0
      %p46 = por %p44, %p45
      %p47 = scmp.ne.s32.totalorder %s36, %s39
      %p48 = scmp.eq.s32.totalorder %s19, 15
      %p49 = por %p47, %p48
      %p50 = scmp.ne.s32.totalorder %s39, %s40
      %p51 = scmp.eq.s32.totalorder %s19, 0
      %p52 = por %p50, %p51
      %p53 = scmp.ne.s32.totalorder %s39, %s40
      %p54 = scmp.eq.s32.totalorder %s20, 15
      %p55 = por %p53, %p54
      %p57 = scmp.ne.s32.totalorder %s40, %s56
      %p58 = scmp.eq.s32.totalorder %s20, 0
      %p59 = por %p57, %p58
      %s60 = ssub.s32 %s22, %s29
      %p61 = scmp.eq.s32.totalorder %s60, 0
      %s63 = sadd.s32 %s62, 1
      %s64 = scalar_select %p61, %s62, %s63
      %p67 = pneg %p61
      %p68 = scmp.eq.s32.totalorder %s14, 15
      %p69 = por %p67, %p68
      %p70 = scmp.ne.s32.totalorder %s62, %s65
      %p71 = scmp.eq.s32.totalorder %s14, 0
      %p72 = por %p70, %p71
      %p73 = scmp.ne.s32.totalorder %s62, %s65
      %p74 = scmp.eq.s32.totalorder %s19, 15
      %p75 = por %p73, %p74
      %p76 = scmp.ne.s32.totalorder %s65, %s66
      %p77 = scmp.eq.s32.totalorder %s19, 0
      %p78 = por %p76, %p77
      %p79 = scmp.ne.s32.totalorder %s65, %s66
      %p80 = scmp.eq.s32.totalorder %s20, 15
      %p81 = por %p79, %p80
      %p83 = scmp.ne.s32.totalorder %s66, %s82
      %p84 = scmp.eq.s32.totalorder %s20, 0
      %p85 = por %p83, %p84
      %s86 = ssub.s32 %s21, %s33
      %p87 = scmp.eq.s32.totalorder %s86, 0
      %s89 = sadd.s32 %s88, 1
      %s90 = scalar_select %p87, %s88, %s89
      %p93 = pneg %p87
      %p94 = scmp.eq.s32.totalorder %s14, 15
      %p95 = por %p93, %p94
      %p96 = scmp.ne.s32.totalorder %s88, %s91
      %p97 = scmp.eq.s32.totalorder %s14, 0
      %p98 = por %p96, %p97
      %p99 = scmp.ne.s32.totalorder %s88, %s91
      %p100 = scmp.eq.s32.totalorder %s19, 15
      %p101 = por %p99, %p100
      %p102 = scmp.ne.s32.totalorder %s91, %s92
      %p103 = scmp.eq.s32.totalorder %s19, 0
      %p104 = por %p102, %p103
      %p105 = scmp.ne.s32.totalorder %s91, %s92
      %p106 = scmp.eq.s32.totalorder %s20, 15
      %p107 = por %p105, %p106
      %p109 = scmp.ne.s32.totalorder %s92, %s108
      %p110 = scmp.eq.s32.totalorder %s20, 0
      %p111 = por %p109, %p110
      %p112 = scmp.le.s32.totalorder 1, %s14
      %p113 = scmp.lt.s32.totalorder %s14, 17
      %p114 = pnand %p112, %p113
      %p115 = pneg %p114
      // Predicated region
      $region9: #{tpu_custom_call.1} parent=5 // pred_check
        _
      $region10: #{tpu_custom_call.1} parent=5 // pred_check_branch
        %117 = sbr.rel (%p114) target = $region12
      $region11: #{tpu_custom_call.1} parent=5 // pred_region
        %s118 = ssub.s32 %s14, 1
      $region12: #{tpu_custom_call.1} parent=5 // pred_fallthru
        _
      %p119 = scmp.lt.s32.totalorder %s14, 16
      // Predicated region
      $region13: #{tpu_custom_call.1} parent=5 // pred_check
        %p120 = pneg %p119
      $region14: #{tpu_custom_call.1} parent=5 // pred_check_branch
        %122 = sbr.rel (%p120) target = $region16
      $region15: #{tpu_custom_call.1} parent=5 // pred_region
        // Predicated region
        $region17: #{tpu_custom_call.1} parent=15 // pred_check
          %p123 = pneg %p46
        $region18: #{tpu_custom_call.1} parent=15 // pred_check_branch
          %125 = sbr.rel (%p123) target = $region20
        $region19: #{tpu_custom_call.1} parent=15 // pred_region
          %s126 = sand.u32 %s36, 1
          %s127 = scalar_lea.sflag [#allocation6], %s126
          %s128 = sand.u32 %s36, 1
          %s129 = smul.addr %s128, 8
          %s130 = scalar_lea.vmem [#allocation5], %s129
          %132 = vsyncadd %s127, 0
          %s133 = smul.addr %s21, 8
          %s134 = scalar_lea.hbm %s0, %s133
          %s136 = sshll.u32 %s134, 4
          %s137 = int_to_ptr.hbm [resolvable:$true] %s136
          %s138 = sshll.u32 %s130, 4
          %s139 = int_to_ptr.vmem [resolvable:$true] %s138
          %141 = dma.hbm_to_vmem [thread:$0]  %s137, 128, %s139, %s127
        $region20: #{tpu_custom_call.1} parent=15 // pred_fallthru
          _
        // Predicated region
        $region21: #{tpu_custom_call.1} parent=15 // pred_check
          %p142 = pneg %p72
        $region22: #{tpu_custom_call.1} parent=15 // pred_check_branch
          %144 = sbr.rel (%p142) target = $region24
        $region23: #{tpu_custom_call.1} parent=15 // pred_region
          %s145 = sand.u32 %s62, 1
          %s146 = scalar_lea.sflag [#allocation8], %s145
          %s147 = sand.u32 %s62, 1
          %s148 = smul.addr %s147, 8
          %s149 = scalar_lea.vmem [#allocation7], %s148
          %151 = vsyncadd %s146, 0
          %s152 = smul.addr %s22, 8
          %s153 = scalar_lea.hbm %s1, %s152
          %s155 = sshll.u32 %s153, 4
          %s156 = int_to_ptr.hbm [resolvable:$true] %s155
          %s157 = sshll.u32 %s149, 4
          %s158 = int_to_ptr.vmem [resolvable:$true] %s157
          %160 = dma.hbm_to_vmem [thread:$0]  %s156, 128, %s158, %s146
        $region24: #{tpu_custom_call.1} parent=15 // pred_fallthru
          _
      $region16: #{tpu_custom_call.1} parent=5 // pred_fallthru
        _
      %p161 = scmp.le.s32.totalorder 1, %s14
      %p162 = scmp.lt.s32.totalorder %s14, 17
      %p163 = pnand %p161, %p162
      %p164 = pneg %p163
      // Predicated region
      $region25: #{tpu_custom_call.1} parent=5 // pred_check
        _
      $region26: #{tpu_custom_call.1} parent=5 // pred_check_branch
        %166 = sbr.rel (%p163) target = $region28
      $region27: #{tpu_custom_call.1} parent=5 // pred_region
        %s167 = ssub.s32 %s14, 1
        %s168 = sand.u32 %s39, 1
        %s169 = scalar_lea.sflag [#allocation6], %s168
        %s170 = sand.u32 %s39, 1
        %s171 = smul.addr %s170, 8
        %s172 = scalar_lea.vmem [#allocation5], %s171
        // Predicated region
        $region29: #{tpu_custom_call.1} parent=27 // pred_check
          %p173 = pneg %p52
        $region30: #{tpu_custom_call.1} parent=27 // pred_check_branch
          %175 = sbr.rel (%p173) target = $region32
        $region31: #{tpu_custom_call.1} parent=27 // pred_region
          %177 = dma.done %s169, 128
        $region32: #{tpu_custom_call.1} parent=27 // pred_fallthru
          _
        %s178 = sand.u32 %s65, 1
        %s179 = scalar_lea.sflag [#allocation8], %s178
        %s180 = sand.u32 %s65, 1
        %s181 = smul.addr %s180, 8
        %s182 = scalar_lea.vmem [#allocation7], %s181
        // Predicated region
        $region33: #{tpu_custom_call.1} parent=27 // pred_check
          %p183 = pneg %p78
        $region34: #{tpu_custom_call.1} parent=27 // pred_check_branch
          %185 = sbr.rel (%p183) target = $region36
        $region35: #{tpu_custom_call.1} parent=27 // pred_region
          %187 = dma.done %s179, 128
        $region36: #{tpu_custom_call.1} parent=27 // pred_fallthru
          _
        %s188 = sand.u32 %s39, 1
        %s189 = scalar_lea.sflag [#allocation6], %s188
        %s190 = sand.u32 %s39, 1
        %s191 = smul.addr %s190, 8
        %s192 = scalar_lea.vmem [#allocation5], %s191
        %p193 = pneg %p52
        %p194 = pneg %p49
        %s195 = sand.u32 %s65, 1
        %s196 = scalar_lea.sflag [#allocation8], %s195
        %s197 = sand.u32 %s65, 1
        %s198 = smul.addr %s197, 8
        %s199 = scalar_lea.vmem [#allocation7], %s198
        %p200 = pneg %p78
        %p201 = pneg %p75
        %p202 = pneg %p104
        %p203 = pneg %p101
        %p204 = scmp.lt.s32.totalorder %s23, 3
        %s205 = scalar_select %p204, %s23, 3
        %s206 = smul.addr %s205, 8
        %s207 = scalar_lea.vmem %s2, %s206
        %p208 = scmp.lt.s32.totalorder %s23, 3
        %s209 = scalar_select %p208, %s23, 3
        %s210 = smul.addr %s209, 8
        %s211 = scalar_lea.vmem %s2, %s210
        %s212 = smul.u32 %s23, 8
        %s213 = smul.u32 %s24, 8
        %p214 = scmp.eq.s32.totalorder %s24, 0
        // Predicated region
        $region37: #{tpu_custom_call.1} parent=27 // pred_check
          %p215 = pneg %p214
        $region38: #{tpu_custom_call.1} parent=27 // pred_check_branch
          %217 = sbr.rel (%p215) target = $region40
        $region39: #{tpu_custom_call.1} parent=27 // pred_region
          %vm218 = vcmask 7168
          %219 = vst.msk [vmem:[#allocation2] sm:$0xff] %vm218, -1e+30
          %220 = vst.msk [vmem:[#allocation3] sm:$0xff] %vm218, 0.0
          %221 = vst.msk [vmem:[#allocation4] sm:$0xff] %vm218, 0.0
        $region40: #{tpu_custom_call.1} parent=27 // pred_fallthru
          _
        %v222 = vld [vmem:[%s172] sm:$0xff]
        %v223 = vmul.f32 %v222, 20.0
        %v224 = vld [vmem:[%s182] sm:$0xff]
        %vm225 = vcmask 261120
        %v227 = vsel %vm225, %v223, 0
        %v230 = vsel %vm225, %v224, 0
        %232 = vmatpush.xpose.msra.mxu0 0.0
        %233 = vmatpush.xpose.msra.mxu0 0.0
        %234 = vmatpush.xpose.msra.mxu0 0.0
        %235 = vmatpush.xpose.msra.mxu0 0.0
        %236 = vmatpush.xpose.msra.mxu0 0.0
        %237 = vmatpush.xpose.msra.mxu0 0.0
        %238 = vmatpush.xpose.msra.mxu0 0.0
        %239 = vmatpush.xpose.msra.mxu0 0.0
        %240 = vmatpush.xpose.msra.mxu0 0.0
        %241 = vmatpush.xpose.msra.mxu0 0.0
        %242 = vmatpush.xpose.msra.mxu0 0.0
        %243 = vmatpush.xpose.msra.mxu0 0.0
        %244 = vmatpush.xpose.msra.mxu0 0.0
        %245 = vmatpush.xpose.msra.mxu0 0.0
        %246 = vmatpush.xpose.msra.mxu0 0.0
        %247 = vmatpush.xpose.msra.mxu0 %v230
        %248 = vmatmul.f32.gmra.mxu0 %v227
        %v249 = vpop.f32.mrf.mxu0
        %v250 = vadd.f32 0.0, %v249
        %251 = vdwg.mxu0
        %p252 = scmp.lt.s32.totalorder %s212, 16
        %s253 = sadd.s32 %s212, 16
        %s254 = ssub.s32 %s212, 16
        %s255 = scalar_select %p252, %s253, %s254
        %s256 = sadd.s32 %s255, 8
        %p257 = scmp.lt.s32.totalorder %s213, %s256
        %s258 = sadd.s32 %s213, 8
        %p259 = scmp.lt.s32.totalorder %s255, %s258
        %p260 = pnand %p257, %p259
        %p261 = pneg %p260
        // Predicated region
        $region41: #{tpu_custom_call.1} parent=27 // pred_check
          _
        $region42: #{tpu_custom_call.1} parent=27 // pred_check_branch
          %263 = sbr.rel (%p260) target = $region44
        $region43: #{tpu_custom_call.1} parent=27 // pred_region
          %v264 = vlaneseq
          %v265 = vshrl.u32 %v264, 7
          %v266 = vstv %s255
          %v267 = vadd.s32 %v266, %v265
          %v268 = vlaneseq
          %v269 = vand.u32 %v268, 127
          %v270 = vstv %s213
          %v271 = vadd.s32 %v270, %v269
          %vm272 = vcmp.eq.s32.totalorder %v271, %v267
          %v273 = vld [vmem:[#allocation4] sm:$0xff]
          %v274 = vsel %vm272, %v250, 0.0
          %vm275 = vcmask 64512
          %v276 = vsel %vm275, %v274, 0.0
          %277 = vadd.xlane.f32.xlu0 %v276
          %v278 = vpop.xlane.xlu0 %277
          %v279 = vadd.f32 %v273, %v278
          %vm280 = vcmask 7168
          %281 = vst.msk [vmem:[#allocation4] sm:$0xff] %vm280, %v279
        $region44: #{tpu_custom_call.1} parent=27 // pred_fallthru
          _
        %s282 = sadd.s32 %s212, 8
        %p283 = scmp.lt.s32.totalorder %s213, %s282
        %p284 = scmp.lt.s32.totalorder %s212, %s258
        %p285 = pnand %p283, %p284
        %p286 = pneg %p285
        // Predicated region
        $region45: #{tpu_custom_call.1} parent=27 // pred_check
          _
        $region46: #{tpu_custom_call.1} parent=27 // pred_check_branch
          %288 = sbr.rel (%p285) target = $region48
        $region47: #{tpu_custom_call.1} parent=27 // pred_region
          %v289 = vlaneseq
          %v290 = vshrl.u32 %v289, 7
          %v291 = vstv %s212
          %v292 = vadd.s32 %v291, %v290
          %v293 = vlaneseq
          %v294 = vand.u32 %v293, 127
          %v295 = vstv %s213
          %v296 = vadd.s32 %v295, %v294
          %vm297 = vcmp.eq.s32.totalorder %v292, %v296
          %v298 = vsel %vm297, -1e+30, %v250
        $region48: #{tpu_custom_call.1} parent=27 // pred_fallthru
          %v299 = vphi 0, %v298
        // Predicated region
        $region49: #{tpu_custom_call.1} parent=27 // pred_check
          %p300 = pneg %p285
        $region50: #{tpu_custom_call.1} parent=27 // pred_check_branch
          %302 = sbr.rel (%p300) target = $region52
        $region51: #{tpu_custom_call.1} parent=27 // pred_region
          _
        $region52: #{tpu_custom_call.1} parent=27 // pred_fallthru
          %v303 = vphi %v299, %v250
        %v304 = vld [vmem:[#allocation2] sm:$0xff]
        %vm305 = vcmask 64512
        %v306 = vsel %vm305, %v303, -inf
        %307 = vmax.xlane.f32.xlu0 %v306
        %v308 = vpop.xlane.xlu0 %307
        %v309 = vmax.f32 %v304, %v308
        %v310 = vsub.f32 %v304, %v309
        %v311 = vmul.f32 %v310, 1.442695
        %v312 = vpow.pop %v311
        %314 = vset.pattern.permute.xlu0 0
        %315 = vperm.xlu0 %314, %v309
        %v316 = vpop.permute.xlu0 %315
        %v318 = vsub.f32 %v303, %v316
        %v319 = vmul.f32 %v318, 1.442695
        %v320 = vpow.pop %v319
        %v321 = vld [vmem:[#allocation3] sm:$0xff]
        %v322 = vmul.f32 %v312, %v321
        %v323 = vsel %vm305, %v320, 0.0
        %324 = vadd.xlane.f32.xlu0 %v323
        %v325 = vpop.xlane.xlu0 %324
        %v326 = vadd.f32 %v322, %v325
        %vm327 = vcmask 7168
        %328 = vst.msk [vmem:[#allocation3] sm:$0xff] %vm327, %v326
        %329 = vst.msk [vmem:[#allocation2] sm:$0xff] %vm327, %v309
        %p330 = scmp.eq.s32.totalorder %s24, 3
        // Predicated region
        $region53: #{tpu_custom_call.1} parent=27 // pred_check
          %p331 = pneg %p330
        $region54: #{tpu_custom_call.1} parent=27 // pred_check_branch
          %333 = sbr.rel (%p331) target = $region56
        $region55: #{tpu_custom_call.1} parent=27 // pred_region
          %v334 = vld [vmem:[#allocation2] sm:$0xff]
          %v335 = vld [vmem:[#allocation3] sm:$0xff]
          %v336 = vlog2.pop %v335
          %v337 = vmul.f32 %v336, 0.6931472
          %v338 = vadd.f32 %v334, %v337
          %v339 = vld [vmem:[#allocation4] sm:$0xff]
          %v340 = vsub.f32 %v338, %v339
          %341 = vst.msk [vmem:[%s211] sm:$0xff] %vm327, %v340
        $region56: #{tpu_custom_call.1} parent=27 // pred_fallthru
          _
        %p342 = scmp.lt.s32.totalorder %s23, 3
        %s343 = scalar_select %p342, %s23, 3
        %s344 = smul.addr %s343, 8
        %s345 = scalar_lea.vmem %s2, %s344
        // Predicated region
        $region57: #{tpu_custom_call.1} parent=27 // pred_check
          %p346 = pneg %p101
        $region58: #{tpu_custom_call.1} parent=27 // pred_check_branch
          %348 = sbr.rel (%p346) target = $region60
        $region59: #{tpu_custom_call.1} parent=27 // pred_region
          _
        $region60: #{tpu_custom_call.1} parent=27 // pred_fallthru
          _
      $region28: #{tpu_custom_call.1} parent=5 // pred_fallthru
        _
      %p349 = scmp.le.s32.totalorder 2, %s14
      // Predicated region
      $region61: #{tpu_custom_call.1} parent=5 // pred_check
        %p350 = pneg %p349
      $region62: #{tpu_custom_call.1} parent=5 // pred_check_branch
        %352 = sbr.rel (%p350) target = $region64
      $region63: #{tpu_custom_call.1} parent=5 // pred_region
        %s353 = ssub.s32 %s14, 2
        // Predicated region
        $region65: #{tpu_custom_call.1} parent=63 // pred_check
          %p354 = pneg %p107
        $region66: #{tpu_custom_call.1} parent=63 // pred_check_branch
          %356 = sbr.rel (%p354) target = $region68
        $region67: #{tpu_custom_call.1} parent=63 // pred_region
          %p357 = scmp.lt.s32.totalorder %s25, 3
          %s358 = scalar_select %p357, %s25, 3
          %s359 = smul.addr %s358, 8
          %s360 = scalar_lea.vmem %s2, %s359
        $region68: #{tpu_custom_call.1} parent=63 // pred_fallthru
          _
      $region64: #{tpu_custom_call.1} parent=5 // pred_fallthru
        _
    $region6: #{tpu_custom_call.1} parent=1 // loop_footer
      %s18 = sadd.s32 1, %s14
    $region7: #{tpu_custom_call.1} parent=1 // loop_footer_branch
      %13 = sbr.rel target = $region3
    $region8: #{tpu_custom_call.1} parent=1 // loop_exit
      _
    %361 = vsyncpa [#allocation6], 1
    %s362 = scalar_lea.sflag [#allocation6], 1
    %363 = vsyncpa %s362, 1
    %364 = vsyncpa [#allocation8], 1
    %s365 = scalar_lea.sflag [#allocation8], 1
    %366 = vsyncpa %s365, 1

</llo_original>
